<compile_context>
chip_gen: v7x
topology: tpu7x:2x2x1
jax: 0.10.0
libtpu: 0.0.40
codegen_flags: <defaults>
</compile_context>

<pallas_src>
import functools
import math

import jax
import jax.numpy as jnp
from jax import lax
from jax.experimental import pallas as pl
from jax.experimental.pallas import tpu as pltpu


def _ntxent_kernel(*refs, tile_r: int, tile_c: int, mask_cols: bool):
    if mask_cols:
        (zi_ref, zj_ref, rs_ref, cs_ref, cb_ref,
         loss_ref, m_scr, l_scr, d_scr) = refs
    else:
        (zi_ref, zj_ref, rs_ref, cs_ref,
         loss_ref, m_scr, l_scr, d_scr) = refs
        cb_ref = None

    i = pl.program_id(0)   # query/row tile    ("parallel")
    j = pl.program_id(1)   # key/column tile   ("arbitrary" / reduction, innermost)

    # ---- init running stats at the first column tile -----------------------
    @pl.when(j == 0)
    def _():
        m_scr[...] = jnp.full_like(m_scr, -jnp.inf)
        l_scr[...] = jnp.zeros_like(l_scr)
        d_scr[...] = jnp.zeros_like(d_scr)

    # Raw (un-normalized) logits on the MXU, contracting the feature dim of
    # BOTH operands (no transpose), f32 accumulation.  Operands are bf16 (or
    # f32) straight from the DMA buffers -- no per-tile normalization work.
    raw = lax.dot_general(zi_ref[...], zj_ref[...], (((1,), (1,)), ((), ())),
                          preferred_element_type=jnp.float32)

    # Rank-1 scaling: rows carry (1/tau)*||z_i||^-1, columns carry ||z_j||^-1.
    sim = raw * rs_ref[...] * cs_ref[...]
    if mask_cols:
        # 0 for real columns, -1e30 for padded columns.  Padded columns never
        # form the first column tile, so m never stays at -inf / -1e30 once a
        # tile has been processed (keeps exp(m_prev - m_new) NaN-free).
        sim = sim + cb_ref[...]

    # ---- online logsumexp update (all stats 2-D (Tr,1), f32) ----------------
    m_prev = m_scr[...]
    m_new = jnp.maximum(m_prev, jnp.max(sim, axis=1, keepdims=True))
    l_scr[...] = (l_scr[...] * jnp.exp(m_prev - m_new)
                  + jnp.sum(jnp.exp(sim - m_new), axis=1, keepdims=True))
    m_scr[...] = m_new

    # ---- diagonal logit, taken from the sim tile itself ----------------------
    # Only tiles whose global column range intersects this row tile's global
    # row range can contain diagonal elements (works for Tr != Tc).
    @pl.when(jnp.logical_and(j * tile_c < (i + 1) * tile_r,
                             (j + 1) * tile_c > i * tile_r))
    def _():
        row = i * tile_r + lax.broadcasted_iota(jnp.int32, sim.shape, 0)
        col = j * tile_c + lax.broadcasted_iota(jnp.int32, sim.shape, 1)
        d_scr[...] = d_scr[...] + jnp.sum(
            jnp.where(row == col, sim, 0.0), axis=1, keepdims=True)

    # ---- finalize: per-row loss = logsumexp(row) - sim[i,i] -----------------
    @pl.when(j == pl.num_programs(1) - 1)
    def _():
        loss_ref[...] = m_scr[...] + jnp.log(l_scr[...]) - d_scr[...]


def _pick_tiles(b: int, d: int, itemsize: int) -> tuple[int, int]:
    """Pick (row_tile, col_tile).

    Large row tile => z_j is re-streamed fewer times (HBM roofline); 256-wide
    column tile is MXU-native.  Shrink for padding waste and to keep the
    double-buffered operand panels + sim tile inside v7x's 64 MiB VMEM.
    """
    if b <= 512:
        return b, b                              # single block, no padding
    tile_c = 256
    tile_r = 1024 if b >= 4096 else 512
    # Waste-aware: padding rounds B up to a multiple of lcm(Tr,Tc) == Tr here.
    while tile_r > tile_c and (-b) % tile_r > max(b // 8, tile_c // 2):
        tile_r //= 2
    # VMEM: 2x double-buffered (Tr,D)+(Tc,D) operand panels + f32 sim tile.
    budget = 40 << 20
    while tile_r > 256 and (2 * (tile_r + tile_c) * d * itemsize
                            + 4 * tile_r * tile_c) > budget:
        tile_r //= 2
    while tile_c > 128 and (2 * (tile_r + tile_c) * d * itemsize
                            + 4 * tile_r * tile_c) > budget:
        tile_c //= 2
    return tile_r, tile_c


def ntxent_loss(z_i: jax.Array, z_j: jax.Array, tau: float = 0.05, *,
                tile_r: int | None = None, tile_c: int | None = None,
                use_bf16_matmul: bool = True) -> jax.Array:
    """NT-Xent loss.  z_i, z_j: (B, D).  Returns scalar f32 loss."""
    assert z_i.shape == z_j.shape and z_i.ndim == 2
    b, d = z_i.shape

    zi32 = z_i.astype(jnp.float32)
    zj32 = z_j.astype(jnp.float32)

    # Per-row inverse L2 norms (O(B*D) XLA, fused with the bf16 cast pass).
    # clamp(ss, 1e-24) under rsqrt == torch's clamp of the norm at 1e-12.
    inv_tau = 1.0 / tau
    r_scale = inv_tau * lax.rsqrt(
        jnp.maximum(jnp.sum(zi32 * zi32, axis=1), 1e-24))      # (B,)
    c_scale = lax.rsqrt(
        jnp.maximum(jnp.sum(zj32 * zj32, axis=1), 1e-24))      # (B,)

    mat_dtype = jnp.bfloat16 if use_bf16_matmul else jnp.float32
    itemsize = jnp.dtype(mat_dtype).itemsize
    zi_m = zi32.astype(mat_dtype)
    zj_m = zj32.astype(mat_dtype)

    if tile_r is None or tile_c is None:
        tr, tc = _pick_tiles(b, d, itemsize)
        tile_r = tile_r or tr
        tile_c = tile_c or tc

    pad_unit = math.lcm(tile_r, tile_c)
    b_pad = ((b + pad_unit - 1) // pad_unit) * pad_unit
    pad = b_pad - b
    if pad:
        zi_m = jnp.pad(zi_m, ((0, pad), (0, 0)))
        zj_m = jnp.pad(zj_m, ((0, pad), (0, 0)))
        r_scale = jnp.pad(r_scale, (0, pad))
        c_scale = jnp.pad(c_scale, (0, pad))
    r_scale = r_scale.reshape(b_pad, 1)
    c_scale = c_scale.reshape(1, b_pad)

    mask_cols = pad > 0
    inputs = [zi_m, zj_m, r_scale, c_scale]
    in_specs = [
        pl.BlockSpec((tile_r, d), lambda i, j: (i, 0)),     # z_i row panel
        pl.BlockSpec((tile_c, d), lambda i, j: (j, 0)),     # z_j col panel
        pl.BlockSpec((tile_r, 1), lambda i, j: (i, 0)),     # row scale (1/tau folded)
        pl.BlockSpec((1, tile_c), lambda i, j: (0, j)),     # col scale
    ]
    if mask_cols:
        c_bias = jnp.where(jnp.arange(b_pad) < b, 0.0, -1e30)
        inputs.append(c_bias.astype(jnp.float32).reshape(1, b_pad))
        in_specs.append(pl.BlockSpec((1, tile_c), lambda i, j: (0, j)))

    n_r = b_pad // tile_r
    n_c = b_pad // tile_c

    kernel = functools.partial(_ntxent_kernel, tile_r=tile_r, tile_c=tile_c,
                               mask_cols=mask_cols)

    per_row = pl.pallas_call(
        kernel,
        out_shape=jax.ShapeDtypeStruct((b_pad, 1), jnp.float32),
        grid_spec=pltpu.PrefetchScalarGridSpec(
            num_scalar_prefetch=0,
            grid=(n_r, n_c),
            in_specs=in_specs,
            out_specs=pl.BlockSpec((tile_r, 1), lambda i, j: (i, 0)),
            scratch_shapes=[pltpu.VMEM((tile_r, 1), jnp.float32)] * 3,
        ),
        compiler_params=pltpu.CompilerParams(
            dimension_semantics=("parallel", "arbitrary"),
            vmem_limit_bytes=64 * 1024 * 1024),
        cost_estimate=pl.CostEstimate(
            flops=2 * b_pad * b_pad * d + 4 * b_pad * b_pad,
            transcendentals=b_pad * b_pad,
            # z_j is re-streamed once per row tile; z_i streamed once.
            bytes_accessed=(n_r + 1) * b_pad * d * itemsize + 16 * b_pad),
    )(*inputs)

    # Tiny final reduction over the B real rows in plain XLA.
    return jnp.sum(per_row[:b, 0]) / b


def _reference_loss(zi, zj, tau=0.05):
    zin = zi / jnp.maximum(jnp.linalg.norm(zi, axis=1, keepdims=True), 1e-12)
    zjn = zj / jnp.maximum(jnp.linalg.norm(zj, axis=1, keepdims=True), 1e-12)
    sim = zin @ zjn.T / tau
    return jnp.mean(jax.nn.logsumexp(sim, axis=1) - jnp.diag(sim))


if __name__ == "__main__":
    key = jax.random.PRNGKey(0)
    k1, k2 = jax.random.split(key)

    # Two views of embeddings, shape (batch, hidden) = (8, 32).
    B, D = 8, 32
    z_i = jax.random.normal(k1, (B, D), dtype=jnp.float32)
    z_j = jax.random.normal(k2, (B, D), dtype=jnp.float32)

    # Default (bf16 MXU operands, f32 accumulation) path.
    loss = ntxent_loss(z_i, z_j, tau=0.05)
    jax.block_until_ready(loss)
    ref = _reference_loss(z_i, z_j, tau=0.05)
    assert bool(jnp.isfinite(loss)), loss
    assert jnp.allclose(loss, ref, rtol=5e-2, atol=5e-2), (loss, ref)

    # Exact-semantics f32 MXU path.
    loss32 = ntxent_loss(z_i, z_j, tau=0.05, use_bf16_matmul=False)
    jax.block_until_ready(loss32)
    assert jnp.allclose(loss32, ref, rtol=1e-4, atol=1e-4), (loss32, ref)

    # Multi-tile + padded-column path (rectangular tiles, diagonal spanning
    # two column tiles, -1e30 column-bias masking).
    B2, D2 = 640, 64
    z_i2 = jax.random.normal(jax.random.PRNGKey(1), (B2, D2), dtype=jnp.float32)
    z_j2 = jax.random.normal(jax.random.PRNGKey(2), (B2, D2), dtype=jnp.float32)
    loss2 = ntxent_loss(z_i2, z_j2, tau=0.05, tile_r=256, tile_c=128)
    jax.block_until_ready(loss2)
    ref2 = _reference_loss(z_i2, z_j2, tau=0.05)
    assert jnp.allclose(loss2, ref2, rtol=5e-2, atol=5e-2), (loss2, ref2)

    print("KERNEL_OK")
</pallas_src>

<mosaic_0001>
module attributes {stable_mosaic.version = 11 : i64} {
  func.func @_ntxent_kernel(%arg0: i32, %arg1: i32, %arg2: memref<8x32xbf16, #tpu.memory_space<vmem>>, %arg3: memref<8x32xbf16, #tpu.memory_space<vmem>>, %arg4: memref<8x1xf32, #tpu.memory_space<vmem>>, %arg5: memref<1x8xf32, #tpu.memory_space<vmem>>, %arg6: memref<8x1xf32, #tpu.memory_space<vmem>>, %arg7: memref<8x1xf32, #tpu.memory_space<vmem>>, %arg8: memref<8x1xf32, #tpu.memory_space<vmem>>, %arg9: memref<8x1xf32, #tpu.memory_space<vmem>>) attributes {dimension_semantics = [#tpu.dimension_semantics<parallel>, #tpu.dimension_semantics<arbitrary>], iteration_bounds = array<i64: 1, 1>, scalar_prefetch = 0 : i64, scratch_operands = 3 : i64, tpu.core_type = #tpu.core_type<tc>, window_params = [{transform_indices = @transform_0, window_bounds = array<i64: 8, 32>}, {transform_indices = @transform_1, window_bounds = array<i64: 8, 32>}, {transform_indices = @transform_2, window_bounds = array<i64: 8, 1>}, {transform_indices = @transform_3, window_bounds = array<i64: 1, 8>}, {transform_indices = @transform_4, window_bounds = array<i64: 8, 1>}]} {
    %c0_i32 = arith.constant 0 : i32
    %0 = arith.cmpi eq, %arg1, %c0_i32 : i32
    %1 = arith.extui %0 : i1 to i32
    %c0_i32_0 = arith.constant 0 : i32
    %2 = arith.cmpi ne, %1, %c0_i32_0 : i32
    scf.if %2 {
      %cst_25 = arith.constant 0xFF800000 : f32
      %42 = vector.broadcast %cst_25 : f32 to vector<8x1xf32>
      %c0_26 = arith.constant 0 : index
      %c0_27 = arith.constant 0 : index
      %43 = vector.load %arg7[%c0_26, %c0_27] : memref<8x1xf32, #tpu.memory_space<vmem>>, vector<8x1xf32>
      tpu.vector_store %arg7[%c0_26, %c0_27], %42 {strides = array<i32>} : memref<8x1xf32, #tpu.memory_space<vmem>>, vector<8x1xf32>,
      %cst_28 = arith.constant 0.000000e+00 : f32
      %44 = vector.broadcast %cst_28 : f32 to vector<8x1xf32>
      %c0_29 = arith.constant 0 : index
      %c0_30 = arith.constant 0 : index
      %45 = vector.load %arg8[%c0_29, %c0_30] : memref<8x1xf32, #tpu.memory_space<vmem>>, vector<8x1xf32>
      tpu.vector_store %arg8[%c0_29, %c0_30], %44 {strides = array<i32>} : memref<8x1xf32, #tpu.memory_space<vmem>>, vector<8x1xf32>,
      %cst_31 = arith.constant 0.000000e+00 : f32
      %46 = vector.broadcast %cst_31 : f32 to vector<8x1xf32>
      %c0_32 = arith.constant 0 : index
      %c0_33 = arith.constant 0 : index
      %47 = vector.load %arg9[%c0_32, %c0_33] : memref<8x1xf32, #tpu.memory_space<vmem>>, vector<8x1xf32>
      tpu.vector_store %arg9[%c0_32, %c0_33], %46 {strides = array<i32>} : memref<8x1xf32, #tpu.memory_space<vmem>>, vector<8x1xf32>,
    } else {
    }
    %c0 = arith.constant 0 : index
    %c0_1 = arith.constant 0 : index
    %3 = vector.load %arg2[%c0, %c0_1] : memref<8x32xbf16, #tpu.memory_space<vmem>>, vector<8x32xbf16>
    %c0_2 = arith.constant 0 : index
    %c0_3 = arith.constant 0 : index
    %4 = vector.load %arg3[%c0_2, %c0_3] : memref<8x32xbf16, #tpu.memory_space<vmem>>, vector<8x32xbf16>
    %cst = arith.constant dense<0.000000e+00> : vector<8x8xf32>
    %5 = tpu.matmul %3, %4, %cst {dimension_numbers = #tpu.dot_dimension_numbers<[1], [1], [0], [0], [0, 0, 1, 0], [], []>} : vector<8x32xbf16>, vector<8x32xbf16>, vector<8x8xf32> -> vector<8x8xf32>
    %c0_4 = arith.constant 0 : index
    %c0_5 = arith.constant 0 : index
    %6 = vector.load %arg4[%c0_4, %c0_5] : memref<8x1xf32, #tpu.memory_space<vmem>>, vector<8x1xf32>
    %7 = vector.broadcast %6 : vector<8x1xf32> to vector<8x8xf32>
    %8 = arith.mulf %5, %7 : vector<8x8xf32>
    %c0_6 = arith.constant 0 : index
    %c0_7 = arith.constant 0 : index
    %9 = vector.load %arg5[%c0_6, %c0_7] : memref<1x8xf32, #tpu.memory_space<vmem>>, vector<1x8xf32>
    %10 = vector.broadcast %9 : vector<1x8xf32> to vector<8x8xf32>
    %11 = arith.mulf %8, %10 : vector<8x8xf32>
    %c0_8 = arith.constant 0 : index
    %c0_9 = arith.constant 0 : index
    %12 = vector.load %arg7[%c0_8, %c0_9] : memref<8x1xf32, #tpu.memory_space<vmem>>, vector<8x1xf32>
    %cst_10 = arith.constant dense<0xFF800000> : vector<8xf32>
    %13 = vector.multi_reduction <maximumf>, %11, %cst_10 [1] : vector<8x8xf32> to vector<8xf32>
    %14 = vector.shape_cast %13 : vector<8xf32> to vector<8x1xf32>
    %15 = arith.maximumf %12, %14 : vector<8x1xf32>
    %c0_11 = arith.constant 0 : index
    %c0_12 = arith.constant 0 : index
    %16 = vector.load %arg8[%c0_11, %c0_12] : memref<8x1xf32, #tpu.memory_space<vmem>>, vector<8x1xf32>
    %17 = arith.subf %12, %15 : vector<8x1xf32>
    %18 = math.exp %17 : vector<8x1xf32>
    %19 = arith.mulf %16, %18 : vector<8x1xf32>
    %20 = vector.broadcast %15 : vector<8x1xf32> to vector<8x8xf32>
    %21 = arith.subf %11, %20 : vector<8x8xf32>
    %22 = math.exp %21 : vector<8x8xf32>
    %cst_13 = arith.constant dense<0.000000e+00> : vector<8xf32>
    %23 = vector.multi_reduction <add>, %22, %cst_13 [1] : vector<8x8xf32> to vector<8xf32>
    %24 = vector.shape_cast %23 : vector<8xf32> to vector<8x1xf32>
    %25 = arith.addf %19, %24 : vector<8x1xf32>
    %c0_14 = arith.constant 0 : index
    %c0_15 = arith.constant 0 : index
    %26 = vector.load %arg8[%c0_14, %c0_15] : memref<8x1xf32, #tpu.memory_space<vmem>>, vector<8x1xf32>
    tpu.vector_store %arg8[%c0_14, %c0_15], %25 {strides = array<i32>} : memref<8x1xf32, #tpu.memory_space<vmem>>, vector<8x1xf32>,
    %c0_16 = arith.constant 0 : index
    %c0_17 = arith.constant 0 : index
    %27 = vector.load %arg7[%c0_16, %c0_17] : memref<8x1xf32, #tpu.memory_space<vmem>>, vector<8x1xf32>
    tpu.vector_store %arg7[%c0_16, %c0_17], %15 {strides = array<i32>} : memref<8x1xf32, #tpu.memory_space<vmem>>, vector<8x1xf32>,
    %c8_i32 = arith.constant 8 : i32
    %28 = arith.muli %arg1, %c8_i32 : i32
    %c1_i32 = arith.constant 1 : i32
    %29 = arith.addi %arg0, %c1_i32 : i32
    %c8_i32_18 = arith.constant 8 : i32
    %30 = arith.muli %29, %c8_i32_18 : i32
    %31 = arith.cmpi slt, %28, %30 : i32
    %c1_i32_19 = arith.constant 1 : i32
    %32 = arith.addi %arg1, %c1_i32_19 : i32
    %c8_i32_20 = arith.constant 8 : i32
    %33 = arith.muli %32, %c8_i32_20 : i32
    %c8_i32_21 = arith.constant 8 : i32
    %34 = arith.muli %arg0, %c8_i32_21 : i32
    %35 = arith.cmpi sgt, %33, %34 : i32
    %36 = arith.andi %31, %35 : i1
    %37 = arith.extui %36 : i1 to i32
    %c0_i32_22 = arith.constant 0 : i32
    %38 = arith.cmpi ne, %37, %c0_i32_22 : i32
    scf.if %38 {
      %c8_i32_25 = arith.constant 8 : i32
      %42 = arith.muli %arg0, %c8_i32_25 : i32
      %43 = tpu.iota {dimensions = array<i32: 0>} : vector<8x8xi32>
      %44 = vector.broadcast %42 : i32 to vector<8x8xi32>
      %45 = arith.addi %44, %43 : vector<8x8xi32>
      %c8_i32_26 = arith.constant 8 : i32
      %46 = arith.muli %arg1, %c8_i32_26 : i32
      %47 = tpu.iota {dimensions = array<i32: 1>} : vector<8x8xi32>
      %48 = vector.broadcast %46 : i32 to vector<8x8xi32>
      %49 = arith.addi %48, %47 : vector<8x8xi32>
      %c0_27 = arith.constant 0 : index
      %c0_28 = arith.constant 0 : index
      %50 = vector.load %arg9[%c0_27, %c0_28] : memref<8x1xf32, #tpu.memory_space<vmem>>, vector<8x1xf32>
      %51 = arith.cmpi eq, %45, %49 : vector<8x8xi32>
      %cst_29 = arith.constant 0.000000e+00 : f32
      %52 = vector.broadcast %cst_29 : f32 to vector<8x8xf32>
      %53 = arith.select %51, %11, %52 : vector<8x8xi1>, vector<8x8xf32>
      %cst_30 = arith.constant dense<0.000000e+00> : vector<8xf32>
      %54 = vector.multi_reduction <add>, %53, %cst_30 [1] : vector<8x8xf32> to vector<8xf32>
      %55 = vector.shape_cast %54 : vector<8xf32> to vector<8x1xf32>
      %56 = arith.addf %50, %55 : vector<8x1xf32>
      %c0_31 = arith.constant 0 : index
      %c0_32 = arith.constant 0 : index
      %57 = vector.load %arg9[%c0_31, %c0_32] : memref<8x1xf32, #tpu.memory_space<vmem>>, vector<8x1xf32>
      tpu.vector_store %arg9[%c0_31, %c0_32], %56 {strides = array<i32>} : memref<8x1xf32, #tpu.memory_space<vmem>>, vector<8x1xf32>,
    } else {
    }
    %c0_i32_23 = arith.constant 0 : i32
    %39 = arith.cmpi eq, %arg1, %c0_i32_23 : i32
    %40 = arith.extui %39 : i1 to i32
    %c0_i32_24 = arith.constant 0 : i32
    %41 = arith.cmpi ne, %40, %c0_i32_24 : i32
    scf.if %41 {
      %c0_25 = arith.constant 0 : index
      %c0_26 = arith.constant 0 : index
      %42 = vector.load %arg7[%c0_25, %c0_26] : memref<8x1xf32, #tpu.memory_space<vmem>>, vector<8x1xf32>
      %c0_27 = arith.constant 0 : index
      %c0_28 = arith.constant 0 : index
      %43 = vector.load %arg8[%c0_27, %c0_28] : memref<8x1xf32, #tpu.memory_space<vmem>>, vector<8x1xf32>
      %44 = math.log %43 : vector<8x1xf32>
      %45 = arith.addf %42, %44 : vector<8x1xf32>
      %c0_29 = arith.constant 0 : index
      %c0_30 = arith.constant 0 : index
      %46 = vector.load %arg9[%c0_29, %c0_30] : memref<8x1xf32, #tpu.memory_space<vmem>>, vector<8x1xf32>
      %47 = arith.subf %45, %46 : vector<8x1xf32>
      %c0_31 = arith.constant 0 : index
      %c0_32 = arith.constant 0 : index
      %48 = vector.load %arg6[%c0_31, %c0_32] : memref<8x1xf32, #tpu.memory_space<vmem>>, vector<8x1xf32>
      tpu.vector_store %arg6[%c0_31, %c0_32], %47 {strides = array<i32>} : memref<8x1xf32, #tpu.memory_space<vmem>>, vector<8x1xf32>,
    } else {
    }
    return
  }
  func.func @transform_0(%arg0: i32, %arg1: i32) -> (i32, i32) {
    %c0_i32 = arith.constant 0 : i32
    %c0_i32_0 = arith.constant 0 : i32
    return %arg0, %c0_i32 : i32, i32
  }
  func.func @transform_1(%arg0: i32, %arg1: i32) -> (i32, i32) {
    %c0_i32 = arith.constant 0 : i32
    %c0_i32_0 = arith.constant 0 : i32
    return %arg1, %c0_i32 : i32, i32
  }
  func.func @transform_2(%arg0: i32, %arg1: i32) -> (i32, i32) {
    %c0_i32 = arith.constant 0 : i32
    %c0_i32_0 = arith.constant 0 : i32
    return %arg0, %c0_i32 : i32, i32
  }
  func.func @transform_3(%arg0: i32, %arg1: i32) -> (i32, i32) {
    %c0_i32 = arith.constant 0 : i32
    %c0_i32_0 = arith.constant 0 : i32
    return %c0_i32, %arg1 : i32, i32
  }
  func.func @transform_4(%arg0: i32, %arg1: i32) -> (i32, i32) {
    %c0_i32 = arith.constant 0 : i32
    %c0_i32_0 = arith.constant 0 : i32
    return %arg0, %c0_i32 : i32, i32
  }
}

</mosaic_0001>

<llo_original>
// kernel: tpu_custom_call.1
$region0: #{tpu_custom_call.1}
  #allocation0 [shape = 'u32[]', space=smem, size = 0x4, offset = 0x4, fixed_abs, tag = 'smem constant byte address 0x4 - core index']
  #allocation1 [shape = 'u32[144,128]{1,0:T(1,128)}', space=vmem, size = 0x12000, scoped, tag = 'internal scratch']
  #allocation2 [shape = 'f32[8,1]{1,0:T(8,128)}', space=vmem, size = 0x1000, scoped, tag = 'scratch operand']
  #allocation3 [shape = 'f32[8,1]{1,0:T(8,128)}', space=vmem, size = 0x1000, scoped, tag = 'scratch operand']
  #allocation4 [shape = 'f32[8,1]{1,0:T(8,128)}', space=vmem, size = 0x1000, scoped, tag = 'scratch operand']
  %s0 = inlined_call_operand.hbm [shape: bf16[8,32], index: 0, kind: input, shape index: {}]
  %s1 = inlined_call_operand.hbm [shape: bf16[8,32], index: 1, kind: input, shape index: {}]
  %s2 = inlined_call_operand.hbm [shape: f32[8,1], index: 2, kind: input, shape index: {}]
  %s3 = inlined_call_operand.hbm [shape: f32[1,8], index: 3, kind: input, shape index: {}]
  %s4 = inlined_call_operand.hbm [shape: f32[8,1], index: 4, kind: output, shape index: {}]
  %s5 = sld [smem:[#allocation0]]
  $region54: #{tpu_custom_call.1} parent=0
    _
  %s7 = ssub.s32 1, %s5
  %s8 = scalar_select 0, %s7, %s5
  $region1: #{tpu_custom_call.1} parent=0
    #allocation5 [shape = 'u8[2048]{0}', space=vmem, size = 0x800, scoped, tag = 'input window, operand 0, single buffered']
    #allocation6 [shape = 's32[1]{0}', space=sflag, size = 0x4, scoped, tag = 'scoped memory for tpu_custom_call.1']
    #allocation7 [shape = 's32[1]{0}', space=sflag, size = 0x4, scoped, tag = 'scoped memory for tpu_custom_call.1']
    #allocation8 [shape = 'u8[2048]{0}', space=vmem, size = 0x800, scoped, tag = 'input window, operand 1, single buffered']
    #allocation9 [shape = 's32[1]{0}', space=sflag, size = 0x4, scoped, tag = 'scoped memory for tpu_custom_call.1']
    #allocation10 [shape = 'u8[4096]{0}', space=vmem, size = 0x1000, scoped, tag = 'input window, operand 2, single buffered']
    #allocation11 [shape = 'u8[512]{0}', space=vmem, size = 0x400, scoped, tag = 'input window, operand 3, single buffered']
    #allocation12 [shape = 's32[1]{0}', space=sflag, size = 0x4, scoped, tag = 'scoped memory for tpu_custom_call.1']
    #allocation13 [shape = 'u8[4096]{0}', space=vmem, size = 0x1000, scoped, tag = 'output window, operand 0, single buffered']
    %9 = vsyncpa [#allocation6], 0
    %10 = vsyncpa [#allocation9], 0
    %11 = vsyncpa [#allocation12], 0
    %12 = vsyncpa [#allocation7], 0
    // Predicated region
    $region2: #{tpu_custom_call.1} parent=1 // pred_check
      _
    $region3: #{tpu_custom_call.1} parent=1 // pred_check_branch
      %14 = sbr.rel (0) target = $region5
    $region4: #{tpu_custom_call.1} parent=1 // pred_region
      %s16 = ssub.s32 64, 64
      %17 = vsyncadd [#allocation6], %s16
      %s19 = sshll.u32 [#allocation5], 4
      %s20 = int_to_ptr.vmem [resolvable:$true] %s19
      %22 = dma.hbm_to_vmem [thread:$0]  %s0, 64, %s20, [#allocation6]
    $region5: #{tpu_custom_call.1} parent=1 // pred_fallthru
      _
    // Predicated region
    $region6: #{tpu_custom_call.1} parent=1 // pred_check
      _
    $region7: #{tpu_custom_call.1} parent=1 // pred_check_branch
      %24 = sbr.rel (0) target = $region9
    $region8: #{tpu_custom_call.1} parent=1 // pred_region
      %s26 = ssub.s32 64, 64
      %27 = vsyncadd [#allocation9], %s26
      %s29 = sshll.u32 [#allocation8], 4
      %s30 = int_to_ptr.vmem [resolvable:$true] %s29
      %32 = dma.hbm_to_vmem [thread:$0]  %s1, 64, %s30, [#allocation9]
    $region9: #{tpu_custom_call.1} parent=1 // pred_fallthru
      _
    // Predicated region
    $region10: #{tpu_custom_call.1} parent=1 // pred_check
      _
    $region11: #{tpu_custom_call.1} parent=1 // pred_check_branch
      %34 = sbr.rel (0) target = $region13
    $region12: #{tpu_custom_call.1} parent=1 // pred_region
      %s36 = ssub.s32 128, 128
      %37 = vsyncadd [#allocation9], %s36
      %s39 = sshll.u32 [#allocation10], 4
      %s40 = int_to_ptr.vmem [resolvable:$true] %s39
      %42 = dma.hbm_to_vmem [thread:$0]  %s2, 128, %s40, [#allocation9]
    $region13: #{tpu_custom_call.1} parent=1 // pred_fallthru
      _
    // Predicated region
    $region14: #{tpu_custom_call.1} parent=1 // pred_check
      _
    $region15: #{tpu_custom_call.1} parent=1 // pred_check_branch
      %44 = sbr.rel (0) target = $region17
    $region16: #{tpu_custom_call.1} parent=1 // pred_region
      %s46 = ssub.s32 16, 16
      %47 = vsyncadd [#allocation12], %s46
      %s49 = sshll.u32 [#allocation11], 4
      %s50 = int_to_ptr.vmem [resolvable:$true] %s49
      %52 = dma.hbm_to_vmem [thread:$0]  %s3, 16, %s50, [#allocation12]
    $region17: #{tpu_custom_call.1} parent=1 // pred_fallthru
      _
    // Predicated region
    $region18: #{tpu_custom_call.1} parent=1 // pred_check
      _
    $region19: #{tpu_custom_call.1} parent=1 // pred_check_branch
      %54 = sbr.rel (0) target = $region21
    $region20: #{tpu_custom_call.1} parent=1 // pred_region
      %55 = dma.done [#allocation6], 64
    $region21: #{tpu_custom_call.1} parent=1 // pred_fallthru
      _
    // Predicated region
    $region22: #{tpu_custom_call.1} parent=1 // pred_check
      _
    $region23: #{tpu_custom_call.1} parent=1 // pred_check_branch
      %57 = sbr.rel (0) target = $region25
    $region24: #{tpu_custom_call.1} parent=1 // pred_region
      %58 = dma.done [#allocation9], 64
    $region25: #{tpu_custom_call.1} parent=1 // pred_fallthru
      _
    // Predicated region
    $region26: #{tpu_custom_call.1} parent=1 // pred_check
      _
    $region27: #{tpu_custom_call.1} parent=1 // pred_check_branch
      %60 = sbr.rel (0) target = $region29
    $region28: #{tpu_custom_call.1} parent=1 // pred_region
      %61 = dma.done [#allocation9], 128
    $region29: #{tpu_custom_call.1} parent=1 // pred_fallthru
      _
    // Predicated region
    $region30: #{tpu_custom_call.1} parent=1 // pred_check
      _
    $region31: #{tpu_custom_call.1} parent=1 // pred_check_branch
      %63 = sbr.rel (0) target = $region33
    $region32: #{tpu_custom_call.1} parent=1 // pred_region
      %64 = dma.done [#allocation12], 16
    $region33: #{tpu_custom_call.1} parent=1 // pred_fallthru
      _
    %p66 = scmp.eq.s32.totalorder 0, 0
    // Predicated region
    $region34: #{tpu_custom_call.1} parent=1 // pred_check
      %p67 = pneg %p66
    $region35: #{tpu_custom_call.1} parent=1 // pred_check_branch
      %69 = sbr.rel (%p67) target = $region37
    $region36: #{tpu_custom_call.1} parent=1 // pred_region
      %vm70 = vcmask 7168
      %71 = vst.msk [vmem:[#allocation2] sm:$0xff] %vm70, -inf
      %72 = vst.msk [vmem:[#allocation3] sm:$0xff] %vm70, 0.0
      %73 = vst.msk [vmem:[#allocation4] sm:$0xff] %vm70, 0.0
    $region37: #{tpu_custom_call.1} parent=1 // pred_fallthru
      _
    %v74 = vld [vmem:[#allocation5] sm:$0xf]
    %v75 = vld [vmem:[#allocation8] sm:$0xf]
    %vm76 = vcmask 261120
    %v78 = vsel %vm76, %v74, 0
    %v81 = vsel %vm76, %v75, 0
    %83 = vmatprep.subr.bf16.mxu0 0
    %84 = vmatpush1.bf16.xpose.msra.mxu0 %v81
    %85 = vmatprep.subr.bf16.mxu0 0
    %86 = vmatpush1.bf16.xpose.msra.mxu0 0
    %87 = vmatprep.subr.bf16.mxu0 0
    %88 = vmatpush1.bf16.xpose.msra.mxu0 0
    %89 = vmatprep.subr.bf16.mxu0 0
    %90 = vmatpush1.bf16.xpose.msra.mxu0 0
    %91 = vmatprep.subr.bf16.mxu0 0
    %92 = vmatpush1.bf16.xpose.msra.mxu0 0
    %93 = vmatprep.subr.bf16.mxu0 0
    %94 = vmatpush1.bf16.xpose.msra.mxu0 0
    %95 = vmatprep.subr.bf16.mxu0 0
    %96 = vmatpush1.bf16.xpose.msra.mxu0 0
    %97 = vmatprep.subr.bf16.mxu0 0
    %98 = vmatpush1.bf16.xpose.msra.mxu0 0
    %99 = vmatprep.subr.bf16.mxu0 0
    %100 = vmatpush1.bf16.xpose.msra.mxu0 0
    %101 = vmatprep.subr.bf16.mxu0 0
    %102 = vmatpush1.bf16.xpose.msra.mxu0 0
    %103 = vmatprep.subr.bf16.mxu0 0
    %104 = vmatpush1.bf16.xpose.msra.mxu0 0
    %105 = vmatprep.subr.bf16.mxu0 0
    %106 = vmatpush1.bf16.xpose.msra.mxu0 0
    %107 = vmatprep.subr.bf16.mxu0 0
    %108 = vmatpush1.bf16.xpose.msra.mxu0 0
    %109 = vmatprep.subr.bf16.mxu0 0
    %110 = vmatpush1.bf16.xpose.msra.mxu0 0
    %111 = vmatprep.subr.bf16.mxu0 0
    %112 = vmatpush1.bf16.xpose.msra.mxu0 0
    %113 = vmatprep.subr.bf16.mxu0 0
    %114 = vmatpush1.bf16.xpose.msra.mxu0 0
    %115 = vmatprep.mubr.bf16.mxu0 0
    %116 = vmatmul.mubr.bf16.gmra.mrb[0].mxu0 %v78
    %v117 = vpop.f32.mrb[0].mxu0
    %v118 = vadd.f32 0.0, %v117
    %v119 = vpop.f32.mrb[0].mxu0
    %v120 = vpop.f32.mrb[0].mxu0
    %v121 = vpop.f32.mrb[0].mxu0
    %122 = vdwg.mxu0
    %v123 = vld [vmem:[#allocation10] sm:$0xff]
    %125 = vset.pattern.permute.xlu0 0
    %126 = vperm.xlu0 %125, %v123
    %v127 = vpop.permute.xlu0 %126
    %v129 = vmul.f32 %v118, %v127
    %v130 = vld [vmem:[#allocation11] sm:$0x1]
    %v132 = vlaneseq
    %v133 = vshrl.u32 %v132, 7
    %v134 = vsub.s32 0, %v133
    %v135 = vrot.slane %v130, %v134
    %v137 = vmul.f32 %v129, %v135
    %v138 = vld [vmem:[#allocation2] sm:$0xff]
    %vm139 = vcmask 64512
    %v140 = vsel %vm139, %v137, -inf
    %141 = vmax.xlane.f32.xlu0 %v140
    %v142 = vpop.xlane.xlu0 %141
    %v143 = vmax.f32 %v138, %v142
    %v144 = vld [vmem:[#allocation3] sm:$0xff]
    %v145 = vsub.f32 %v138, %v143
    %v146 = vmul.f32 %v145, 1.442695
    %v147 = vpow.pop %v146
    %v148 = vmul.f32 %v144, %v147
    %150 = vset.pattern.permute.xlu0 0
    %151 = vperm.xlu0 %150, %v143
    %v152 = vpop.permute.xlu0 %151
    %v154 = vsub.f32 %v137, %v152
    %v155 = vmul.f32 %v154, 1.442695
    %v156 = vpow.pop %v155
    %v157 = vsel %vm139, %v156, 0.0
    %158 = vadd.xlane.f32.xlu0 %v157
    %v159 = vpop.xlane.xlu0 %158
    %v160 = vadd.f32 %v148, %v159
    %vm161 = vcmask 7168
    %162 = vst.msk [vmem:[#allocation3] sm:$0xff] %vm161, %v160
    %163 = vst.msk [vmem:[#allocation2] sm:$0xff] %vm161, %v143
    %s164 = smul.u32 0, 8
    %s165 = sadd.s32 0, 1
    %s166 = smul.u32 %s165, 8
    %p167 = scmp.lt.s32.totalorder %s164, %s166
    %s168 = sadd.s32 0, 1
    %s169 = smul.u32 %s168, 8
    %s170 = smul.u32 0, 8
    %p171 = scmp.gt.s32.totalorder %s169, %s170
    %p172 = pnand %p167, %p171
    %p173 = pneg %p172
    // Predicated region
    $region38: #{tpu_custom_call.1} parent=1 // pred_check
      _
    $region39: #{tpu_custom_call.1} parent=1 // pred_check_branch
      %175 = sbr.rel (%p172) target = $region41
    $region40: #{tpu_custom_call.1} parent=1 // pred_region
      %v176 = vlaneseq
      %v177 = vshrl.u32 %v176, 7
      %v178 = vstv %s170
      %v179 = vadd.s32 %v178, %v177
      %v180 = vlaneseq
      %v181 = vand.u32 %v180, 127
      %v182 = vstv %s164
      %v183 = vadd.s32 %v182, %v181
      %v184 = vld [vmem:[#allocation4] sm:$0xff]
      %vm185 = vcmp.eq.s32.totalorder %v179, %v183
      %v186 = vsel %vm185, %v137, 0.0
      %v187 = vsel %vm139, %v186, 0.0
      %188 = vadd.xlane.f32.xlu0 %v187
      %v189 = vpop.xlane.xlu0 %188
      %v190 = vadd.f32 %v184, %v189
      %191 = vst.msk [vmem:[#allocation4] sm:$0xff] %vm161, %v190
    $region41: #{tpu_custom_call.1} parent=1 // pred_fallthru
      _
    // Predicated region
    $region42: #{tpu_custom_call.1} parent=1 // pred_check
      %p192 = pneg %p66
    $region43: #{tpu_custom_call.1} parent=1 // pred_check_branch
      %194 = sbr.rel (%p192) target = $region45
    $region44: #{tpu_custom_call.1} parent=1 // pred_region
      %v195 = vld [vmem:[#allocation2] sm:$0xff]
      %v196 = vld [vmem:[#allocation3] sm:$0xff]
      %v197 = vlog2.pop %v196
      %v198 = vmul.f32 %v197, 0.6931472
      %v199 = vadd.f32 %v195, %v198
      %v200 = vld [vmem:[#allocation4] sm:$0xff]
      %v201 = vsub.f32 %v199, %v200
      %202 = vst.msk [vmem:[#allocation13] sm:$0xff] %vm161, %v201
    $region45: #{tpu_custom_call.1} parent=1 // pred_fallthru
      _
    // Predicated region
    $region46: #{tpu_custom_call.1} parent=1 // pred_check
      _
    $region47: #{tpu_custom_call.1} parent=1 // pred_check_branch
      %204 = sbr.rel (0) target = $region49
    $region48: #{tpu_custom_call.1} parent=1 // pred_region
      %s206 = ssub.s32 128, 128
      %207 = vsyncadd [#allocation7], %s206
      %s209 = sshll.u32 [#allocation13], 4
      %s210 = int_to_ptr.vmem [resolvable:$true] %s209
      %212 = dma.vmem_to_hbm [thread:$0]  %s210, 128, %s4, [#allocation7]
    $region49: #{tpu_custom_call.1} parent=1 // pred_fallthru
      _
    // Predicated region
    $region50: #{tpu_custom_call.1} parent=1 // pred_check
      _
    $region51: #{tpu_custom_call.1} parent=1 // pred_check_branch
      %214 = sbr.rel (0) target = $region53
    $region52: #{tpu_custom_call.1} parent=1 // pred_region
      %215 = dma.done [#allocation7], 128
    $region53: #{tpu_custom_call.1} parent=1 // pred_fallthru
      _
    %216 = vsyncpa [#allocation6], 1
    %217 = vsyncpa [#allocation9], 1
    %218 = vsyncpa [#allocation12], 1
    %219 = vsyncpa [#allocation7], 1

</llo_original>
